<compile_context>
chip_gen: v7x
topology: tpu7x:2x2x1
jax: 0.10.0
libtpu: 0.0.40
codegen_flags: <defaults>
</compile_context>

<pallas_src>
import jax
import jax.numpy as jnp
from jax.experimental import pallas as pl
from jax.experimental.pallas import tpu as pltpu

EPS = 1e-5


# ----------------------------------------------------------------------------- kernel

def fused_bn_add_relu_kernel(x_ref, gb_ref, o_ref):
    """out = relu(x + BN_train(x; gamma, beta)) fully in VMEM.

    x_ref : (N, C, HW) f32   -- NCHW with H,W merged (lane-dense: HW = 256)
    gb_ref: (C, 2)     f32   -- packed [gamma | beta] (one tiny param DMA)
    o_ref : (N, C, HW) f32
    """
    n, c, hw = x_ref.shape
    inv_m = 1.0 / (n * hw)

    # --- single-pass statistics: per-channel sum and sum of squares -------------
    # x slices are loaded once and reused by the apply pass below (~32 vregs total).
    xs = [x_ref[i] for i in range(n)]                     # each (C, HW)
    s = jnp.zeros((c, 1), jnp.float32)
    s2 = jnp.zeros((c, 1), jnp.float32)
    for xi in xs:
        s = s + jnp.sum(xi, axis=1, keepdims=True)
        s2 = s2 + jnp.sum(xi * xi, axis=1, keepdims=True)
    mean = s * inv_m                                      # (C, 1)
    # biased (training-mode) variance; clamp >= 0 against single-pass cancellation
    var = jnp.maximum(s2 * inv_m - mean * mean, 0.0)      # (C, 1)

    # --- fold BN + residual add into a single per-channel affine ----------------
    gamma = gb_ref[:, 0:1]                                # (C, 1)
    beta = gb_ref[:, 1:2]                                 # (C, 1)
    scale = gamma * jax.lax.rsqrt(var + EPS)              # (C, 1)
    scale1 = 1.0 + scale                                  # x + (x*scale+shift) == x*scale1 + shift
    shift = beta - mean * scale                           # (C, 1)

    # hoist the lane broadcasts out of the unrolled N loop (no CSE of broadcast_in_dim)
    scale_b = jnp.broadcast_to(scale1, (c, hw))
    shift_b = jnp.broadcast_to(shift, (c, hw))

    # --- apply: out = relu(x*scale1 + shift), lane-dense unmasked stores ---------
    for i, xi in enumerate(xs):
        o_ref[i] = jnp.maximum(xi * scale_b + shift_b, 0.0).astype(o_ref.dtype)


# ----------------------------------------------------------------------------- wrapper

def fused_block(x3d, gamma, beta):
    """x3d: (N, C, HW) f32; gamma/beta: (C,) -> (N, C, HW)."""
    N, C, HW = x3d.shape
    gb = jnp.stack([gamma, beta], axis=1)                 # (C, 2) packed BN params
    return pl.pallas_call(
        fused_bn_add_relu_kernel,
        out_shape=jax.ShapeDtypeStruct((N, C, HW), x3d.dtype),
        grid_spec=pltpu.PrefetchScalarGridSpec(
            num_scalar_prefetch=0,
            grid=(1,),
            in_specs=[
                pl.BlockSpec((N, C, HW), lambda i: (0, 0, 0)),
                pl.BlockSpec((C, 2), lambda i: (0, 0)),
            ],
            out_specs=pl.BlockSpec((N, C, HW), lambda i: (0, 0, 0)),
        ),
        compiler_params=pltpu.CompilerParams(dimension_semantics=("arbitrary",)),
        # NOTE: input_output_aliases={0: 0} would let XLA reuse x's HBM buffer, but the
        # same input is consumed by the pure-JAX verification below, so it is omitted.
    )(x3d, gb)


@jax.jit
def model_forward(x_nchw, params):
    """Reference Model.forward only runs convBlock1 (and has no return statement);
    we return block-1's output.  conv1/bn1/conv2 are dead code in the reference
    forward and are intentionally elided (see header notes)."""
    p = params["block1"]
    N, C, H, W = x_nchw.shape
    x3d = x_nchw.reshape(N, C, H * W)                     # lane-dense last dim (H*W = 256)
    out = fused_block(x3d, p["g2"], p["beta2"])
    return out.reshape(N, C, H, W)


# ----------------------------------------------------------------------------- pure-JAX literal reference (for verification)

def _conv_ref(u, w, b):
    y = jax.lax.conv_general_dilated(
        u, w, (1, 1), "SAME", dimension_numbers=("NCHW", "OIHW", "NCHW"))
    return y + b[None, :, None, None]


def _bn_train_ref(u, g, be):
    mean = u.mean(axis=(0, 2, 3), keepdims=True)
    var = u.var(axis=(0, 2, 3), keepdims=True)            # biased, training-mode BN
    return (u - mean) * jax.lax.rsqrt(var + EPS) * g[None, :, None, None] \
        + be[None, :, None, None]


def ref_forward(x, p):
    """Literal translation of conv_res_block.forward (dead chain included)."""
    x1 = jax.nn.relu(_bn_train_ref(_conv_ref(x, p["w1"], p["b1"]), p["g1"], p["beta1"]))
    x1 = _conv_ref(x1, p["w2"], p["b2"])                  # overwritten, as in the reference
    x1 = _bn_train_ref(x, p["g2"], p["beta2"])
    return jax.nn.relu(x + x1)


# ----------------------------------------------------------------------------- params / main

def init_block_params(key, ch_in, ch_out):
    ks = jax.random.split(key, 6)
    return {
        # conv/bn1 params exist in the reference module but never influence its output;
        # they are only used by the pure-JAX literal reference check below.
        "w1": 0.05 * jax.random.normal(ks[0], (ch_out, ch_in, 3, 3), jnp.float32),
        "b1": 0.05 * jax.random.normal(ks[1], (ch_out,), jnp.float32),
        "w2": 0.05 * jax.random.normal(ks[2], (ch_out, ch_out, 3, 3), jnp.float32),
        "b2": 0.05 * jax.random.normal(ks[3], (ch_out,), jnp.float32),
        "g1": 1.0 + 0.1 * jax.random.normal(ks[4], (ch_out,), jnp.float32),
        "beta1": 0.1 * jax.random.normal(ks[5], (ch_out,), jnp.float32),
        # batch2: applied to the block input x (requires ch_in == ch_out).
        "g2": 1.0 + 0.05 * jax.random.normal(ks[4], (ch_out,), jnp.float32),
        "beta2": 0.05 * jax.random.normal(ks[5], (ch_out,), jnp.float32),
    }


if __name__ == "__main__":
    key = jax.random.PRNGKey(0)
    k_x, k_p = jax.random.split(key)

    # ip_channel must equal convBlock1's ch_out (=64) for the literal reference
    # forward to be shape-consistent (see header notes).
    N, C, H, W = 2, 64, 16, 16
    x_nchw = jax.random.normal(k_x, (N, C, H, W), jnp.float32)   # PyTorch layout

    params = {"block1": init_block_params(k_p, C, 64)}
    # TODO(synk): convBlock2 / convBlock3 params exist in the reference __init__ but are
    # never used by Model.forward, so they are not materialized here.

    out = jax.block_until_ready(model_forward(x_nchw, params))

    # --- verification against the literal pure-JAX reference ---
    ref = ref_forward(x_nchw, params["block1"])
    err = float(jnp.max(jnp.abs(out - ref)))
    tol = 1e-5 * float(jnp.max(jnp.abs(ref))) + 1e-5             # tight rel+abs tolerance
    assert out.shape == (N, 64, H, W)
    assert err < tol, f"block output mismatch: max abs err {err} (tol {tol})"

    print("KERNEL_OK")
</pallas_src>

<mosaic_0001>
module attributes {stable_mosaic.version = 11 : i64} {
  func.func @fused_bn_add_relu_kernel(%arg0: i32, %arg1: memref<2x64x256xf32, #tpu.memory_space<vmem>>, %arg2: memref<64x2xf32, #tpu.memory_space<vmem>>, %arg3: memref<2x64x256xf32, #tpu.memory_space<vmem>>) attributes {dimension_semantics = [#tpu.dimension_semantics<arbitrary>], iteration_bounds = array<i64: 1>, scalar_prefetch = 0 : i64, scratch_operands = 0 : i64, tpu.core_type = #tpu.core_type<tc>, window_params = [{pipeline_mode = #tpu.pipeline_mode<synchronous>, transform_indices = @transform_0, window_bounds = array<i64: 2, 64, 256>}, {pipeline_mode = #tpu.pipeline_mode<synchronous>, transform_indices = @transform_1, window_bounds = array<i64: 64, 2>}, {pipeline_mode = #tpu.pipeline_mode<synchronous>, transform_indices = @transform_2, window_bounds = array<i64: 2, 64, 256>}]} {
    %c0 = arith.constant 0 : index
    %c0_0 = arith.constant 0 : index
    %c0_1 = arith.constant 0 : index
    %0 = vector.load %arg1[%c0, %c0_0, %c0_1] : memref<2x64x256xf32, #tpu.memory_space<vmem>>, vector<1x64x256xf32>
    %1 = vector.shape_cast %0 : vector<1x64x256xf32> to vector<64x256xf32>
    %c1 = arith.constant 1 : index
    %c0_2 = arith.constant 0 : index
    %c0_3 = arith.constant 0 : index
    %2 = vector.load %arg1[%c1, %c0_2, %c0_3] : memref<2x64x256xf32, #tpu.memory_space<vmem>>, vector<1x64x256xf32>
    %3 = vector.shape_cast %2 : vector<1x64x256xf32> to vector<64x256xf32>
    %cst = arith.constant 0.000000e+00 : f32
    %4 = vector.broadcast %cst : f32 to vector<64x1xf32>
    %cst_4 = arith.constant 0.000000e+00 : f32
    %5 = vector.broadcast %cst_4 : f32 to vector<64x1xf32>
    %cst_5 = arith.constant dense<0.000000e+00> : vector<64xf32>
    %6 = vector.multi_reduction <add>, %1, %cst_5 [1] : vector<64x256xf32> to vector<64xf32>
    %7 = vector.shape_cast %6 : vector<64xf32> to vector<64x1xf32>
    %8 = arith.addf %4, %7 : vector<64x1xf32>
    %9 = arith.mulf %1, %1 : vector<64x256xf32>
    %cst_6 = arith.constant dense<0.000000e+00> : vector<64xf32>
    %10 = vector.multi_reduction <add>, %9, %cst_6 [1] : vector<64x256xf32> to vector<64xf32>
    %11 = vector.shape_cast %10 : vector<64xf32> to vector<64x1xf32>
    %12 = arith.addf %5, %11 : vector<64x1xf32>
    %cst_7 = arith.constant dense<0.000000e+00> : vector<64xf32>
    %13 = vector.multi_reduction <add>, %3, %cst_7 [1] : vector<64x256xf32> to vector<64xf32>
    %14 = vector.shape_cast %13 : vector<64xf32> to vector<64x1xf32>
    %15 = arith.addf %8, %14 : vector<64x1xf32>
    %16 = arith.mulf %3, %3 : vector<64x256xf32>
    %cst_8 = arith.constant dense<0.000000e+00> : vector<64xf32>
    %17 = vector.multi_reduction <add>, %16, %cst_8 [1] : vector<64x256xf32> to vector<64xf32>
    %18 = vector.shape_cast %17 : vector<64xf32> to vector<64x1xf32>
    %19 = arith.addf %12, %18 : vector<64x1xf32>
    %cst_9 = arith.constant 0.001953125 : f32
    %20 = vector.broadcast %cst_9 : f32 to vector<64x1xf32>
    %21 = arith.mulf %15, %20 : vector<64x1xf32>
    %cst_10 = arith.constant 0.001953125 : f32
    %22 = vector.broadcast %cst_10 : f32 to vector<64x1xf32>
    %23 = arith.mulf %19, %22 : vector<64x1xf32>
    %24 = arith.mulf %21, %21 : vector<64x1xf32>
    %25 = arith.subf %23, %24 : vector<64x1xf32>
    %cst_11 = arith.constant 0.000000e+00 : f32
    %26 = vector.broadcast %cst_11 : f32 to vector<64x1xf32>
    %27 = arith.maximumf %25, %26 : vector<64x1xf32>
    %c0_12 = arith.constant 0 : index
    %c0_13 = arith.constant 0 : index
    %28 = vector.load %arg2[%c0_12, %c0_13] : memref<64x2xf32, #tpu.memory_space<vmem>>, vector<64x1xf32>
    %c0_14 = arith.constant 0 : index
    %c1_15 = arith.constant 1 : index
    %29 = vector.load %arg2[%c0_14, %c1_15] : memref<64x2xf32, #tpu.memory_space<vmem>>, vector<64x1xf32>
    %cst_16 = arith.constant 9.99999974E-6 : f32
    %30 = vector.broadcast %cst_16 : f32 to vector<64x1xf32>
    %31 = arith.addf %27, %30 : vector<64x1xf32>
    %32 = math.rsqrt %31 : vector<64x1xf32>
    %33 = arith.mulf %28, %32 : vector<64x1xf32>
    %cst_17 = arith.constant 1.000000e+00 : f32
    %34 = vector.broadcast %cst_17 : f32 to vector<64x1xf32>
    %35 = arith.addf %34, %33 : vector<64x1xf32>
    %36 = arith.mulf %21, %33 : vector<64x1xf32>
    %37 = arith.subf %29, %36 : vector<64x1xf32>
    %38 = vector.shape_cast %35 : vector<64x1xf32> to vector<64x1xf32>
    %39 = vector.broadcast %38 : vector<64x1xf32> to vector<64x256xf32>
    %40 = vector.shape_cast %37 : vector<64x1xf32> to vector<64x1xf32>
    %41 = vector.broadcast %40 : vector<64x1xf32> to vector<64x256xf32>
    %42 = arith.mulf %1, %39 : vector<64x256xf32>
    %43 = arith.addf %42, %41 : vector<64x256xf32>
    %cst_18 = arith.constant 0.000000e+00 : f32
    %44 = vector.broadcast %cst_18 : f32 to vector<64x256xf32>
    %45 = arith.maximumf %43, %44 : vector<64x256xf32>
    %c0_19 = arith.constant 0 : index
    %c0_20 = arith.constant 0 : index
    %c0_21 = arith.constant 0 : index
    %46 = vector.load %arg3[%c0_19, %c0_20, %c0_21] : memref<2x64x256xf32, #tpu.memory_space<vmem>>, vector<1x64x256xf32>
    %47 = vector.shape_cast %46 : vector<1x64x256xf32> to vector<64x256xf32>
    %48 = vector.shape_cast %45 : vector<64x256xf32> to vector<1x64x256xf32>
    tpu.vector_store %arg3[%c0_19, %c0_20, %c0_21], %48 {strides = array<i32>} : memref<2x64x256xf32, #tpu.memory_space<vmem>>, vector<1x64x256xf32>,
    %49 = arith.mulf %3, %39 : vector<64x256xf32>
    %50 = arith.addf %49, %41 : vector<64x256xf32>
    %cst_22 = arith.constant 0.000000e+00 : f32
    %51 = vector.broadcast %cst_22 : f32 to vector<64x256xf32>
    %52 = arith.maximumf %50, %51 : vector<64x256xf32>
    %c1_23 = arith.constant 1 : index
    %c0_24 = arith.constant 0 : index
    %c0_25 = arith.constant 0 : index
    %53 = vector.load %arg3[%c1_23, %c0_24, %c0_25] : memref<2x64x256xf32, #tpu.memory_space<vmem>>, vector<1x64x256xf32>
    %54 = vector.shape_cast %53 : vector<1x64x256xf32> to vector<64x256xf32>
    %55 = vector.shape_cast %52 : vector<64x256xf32> to vector<1x64x256xf32>
    tpu.vector_store %arg3[%c1_23, %c0_24, %c0_25], %55 {strides = array<i32>} : memref<2x64x256xf32, #tpu.memory_space<vmem>>, vector<1x64x256xf32>,
    return
  }
  func.func @transform_0(%arg0: i32) -> (i32, i32, i32) {
    %c0_i32 = arith.constant 0 : i32
    %c0_i32_0 = arith.constant 0 : i32
    %c0_i32_1 = arith.constant 0 : i32
    %c0_i32_2 = arith.constant 0 : i32
    return %c0_i32, %c0_i32_0, %c0_i32_1 : i32, i32, i32
  }
  func.func @transform_1(%arg0: i32) -> (i32, i32) {
    %c0_i32 = arith.constant 0 : i32
    %c0_i32_0 = arith.constant 0 : i32
    %c0_i32_1 = arith.constant 0 : i32
    return %c0_i32, %c0_i32_0 : i32, i32
  }
  func.func @transform_2(%arg0: i32) -> (i32, i32, i32) {
    %c0_i32 = arith.constant 0 : i32
    %c0_i32_0 = arith.constant 0 : i32
    %c0_i32_1 = arith.constant 0 : i32
    %c0_i32_2 = arith.constant 0 : i32
    return %c0_i32, %c0_i32_0, %c0_i32_1 : i32, i32, i32
  }
}

</mosaic_0001>

<llo_original>
// kernel: model_forward.1
$region0: #{model_forward.1}
  #allocation0 [shape = 'u32[]', space=smem, size = 0x4, offset = 0x4, fixed_abs, tag = 'smem constant byte address 0x4 - core index']
  #allocation1 [shape = 'u32[144,128]{1,0:T(1,128)}', space=vmem, size = 0x12000, scoped, tag = 'internal scratch']
  %s0 = inlined_call_operand.vmem [shape: f32[2,64,256], index: 0, kind: input, shape index: {}]
  %s1 = inlined_call_operand.vmem [shape: f32[64,2], index: 1, kind: input, shape index: {}]
  %s2 = inlined_call_operand.vmem [shape: f32[2,64,256], index: 2, kind: output, shape index: {}]
  %s3 = sld [smem:[#allocation0]]
  $region18: #{model_forward.1} parent=0
    _
  %s5 = ssub.s32 1, %s3
  %s6 = scalar_select 0, %s5, %s3
  // Predicated region
  $region2: #{model_forward.1} parent=0 // pred_check
    _
  $region3: #{model_forward.1} parent=0 // pred_check_branch
    %8 = sbr.rel (0) target = $region5
  $region4: #{model_forward.1} parent=0 // pred_region
    _
  $region5: #{model_forward.1} parent=0 // pred_fallthru
    _
  // Predicated region
  $region6: #{model_forward.1} parent=0 // pred_check
    _
  $region7: #{model_forward.1} parent=0 // pred_check_branch
    %10 = sbr.rel (0) target = $region9
  $region8: #{model_forward.1} parent=0 // pred_region
    _
  $region9: #{model_forward.1} parent=0 // pred_fallthru
    _
  %v11 = vld [vmem:[%s0] sm:$0xff]
  %v12 = vld [vmem:[%s0 + $0x8] sm:$0xff]
  %v13 = vld [vmem:[%s0 + $0x10] sm:$0xff]
  %v14 = vld [vmem:[%s0 + $0x18] sm:$0xff]
  %v15 = vld [vmem:[%s0 + $0x20] sm:$0xff]
  %v16 = vld [vmem:[%s0 + $0x28] sm:$0xff]
  %v17 = vld [vmem:[%s0 + $0x30] sm:$0xff]
  %v18 = vld [vmem:[%s0 + $0x38] sm:$0xff]
  %v19 = vld [vmem:[%s0 + $0x40] sm:$0xff]
  %v20 = vld [vmem:[%s0 + $0x48] sm:$0xff]
  %v21 = vld [vmem:[%s0 + $0x50] sm:$0xff]
  %v22 = vld [vmem:[%s0 + $0x58] sm:$0xff]
  %v23 = vld [vmem:[%s0 + $0x60] sm:$0xff]
  %v24 = vld [vmem:[%s0 + $0x68] sm:$0xff]
  %v25 = vld [vmem:[%s0 + $0x70] sm:$0xff]
  %v26 = vld [vmem:[%s0 + $0x78] sm:$0xff]
  %s27 = scalar_lea.vmem %s0, 128
  %v28 = vld [vmem:[%s27] sm:$0xff]
  %v29 = vld [vmem:[%s27 + $0x8] sm:$0xff]
  %v30 = vld [vmem:[%s27 + $0x10] sm:$0xff]
  %v31 = vld [vmem:[%s27 + $0x18] sm:$0xff]
  %v32 = vld [vmem:[%s27 + $0x20] sm:$0xff]
  %v33 = vld [vmem:[%s27 + $0x28] sm:$0xff]
  %v34 = vld [vmem:[%s27 + $0x30] sm:$0xff]
  %v35 = vld [vmem:[%s27 + $0x38] sm:$0xff]
  %v36 = vld [vmem:[%s27 + $0x40] sm:$0xff]
  %v37 = vld [vmem:[%s27 + $0x48] sm:$0xff]
  %v38 = vld [vmem:[%s27 + $0x50] sm:$0xff]
  %v39 = vld [vmem:[%s27 + $0x58] sm:$0xff]
  %v40 = vld [vmem:[%s27 + $0x60] sm:$0xff]
  %v41 = vld [vmem:[%s27 + $0x68] sm:$0xff]
  %v42 = vld [vmem:[%s27 + $0x70] sm:$0xff]
  %v43 = vld [vmem:[%s27 + $0x78] sm:$0xff]
  %v44 = vadd.f32 %v11, %v12
  %45 = vadd.xlane.f32.xlu0 %v44
  %v46 = vpop.xlane.xlu0 %45
  %v47 = vadd.f32 %v13, %v14
  %48 = vadd.xlane.f32.xlu0 %v47
  %v49 = vpop.xlane.xlu0 %48
  %v50 = vadd.f32 %v15, %v16
  %51 = vadd.xlane.f32.xlu0 %v50
  %v52 = vpop.xlane.xlu0 %51
  %v53 = vadd.f32 %v17, %v18
  %54 = vadd.xlane.f32.xlu0 %v53
  %v55 = vpop.xlane.xlu0 %54
  %v56 = vadd.f32 %v19, %v20
  %57 = vadd.xlane.f32.xlu0 %v56
  %v58 = vpop.xlane.xlu0 %57
  %v59 = vadd.f32 %v21, %v22
  %60 = vadd.xlane.f32.xlu0 %v59
  %v61 = vpop.xlane.xlu0 %60
  %v62 = vadd.f32 %v23, %v24
  %63 = vadd.xlane.f32.xlu0 %v62
  %v64 = vpop.xlane.xlu0 %63
  %v65 = vadd.f32 %v25, %v26
  %66 = vadd.xlane.f32.xlu0 %v65
  %v67 = vpop.xlane.xlu0 %66
  %v68 = vadd.f32 %v46, 0.0
  %v69 = vadd.f32 %v49, 0.0
  %v70 = vadd.f32 %v52, 0.0
  %v71 = vadd.f32 %v55, 0.0
  %v72 = vadd.f32 %v58, 0.0
  %v73 = vadd.f32 %v61, 0.0
  %v74 = vadd.f32 %v64, 0.0
  %v75 = vadd.f32 %v67, 0.0
  %v76 = vmul.f32 %v11, %v11
  %v77 = vmul.f32 %v12, %v12
  %v78 = vmul.f32 %v13, %v13
  %v79 = vmul.f32 %v14, %v14
  %v80 = vmul.f32 %v15, %v15
  %v81 = vmul.f32 %v16, %v16
  %v82 = vmul.f32 %v17, %v17
  %v83 = vmul.f32 %v18, %v18
  %v84 = vmul.f32 %v19, %v19
  %v85 = vmul.f32 %v20, %v20
  %v86 = vmul.f32 %v21, %v21
  %v87 = vmul.f32 %v22, %v22
  %v88 = vmul.f32 %v23, %v23
  %v89 = vmul.f32 %v24, %v24
  %v90 = vmul.f32 %v25, %v25
  %v91 = vmul.f32 %v26, %v26
  %v92 = vadd.f32 %v76, %v77
  %93 = vadd.xlane.f32.xlu0 %v92
  %v94 = vpop.xlane.xlu0 %93
  %v95 = vadd.f32 %v78, %v79
  %96 = vadd.xlane.f32.xlu0 %v95
  %v97 = vpop.xlane.xlu0 %96
  %v98 = vadd.f32 %v80, %v81
  %99 = vadd.xlane.f32.xlu0 %v98
  %v100 = vpop.xlane.xlu0 %99
  %v101 = vadd.f32 %v82, %v83
  %102 = vadd.xlane.f32.xlu0 %v101
  %v103 = vpop.xlane.xlu0 %102
  %v104 = vadd.f32 %v84, %v85
  %105 = vadd.xlane.f32.xlu0 %v104
  %v106 = vpop.xlane.xlu0 %105
  %v107 = vadd.f32 %v86, %v87
  %108 = vadd.xlane.f32.xlu0 %v107
  %v109 = vpop.xlane.xlu0 %108
  %v110 = vadd.f32 %v88, %v89
  %111 = vadd.xlane.f32.xlu0 %v110
  %v112 = vpop.xlane.xlu0 %111
  %v113 = vadd.f32 %v90, %v91
  %114 = vadd.xlane.f32.xlu0 %v113
  %v115 = vpop.xlane.xlu0 %114
  %v116 = vadd.f32 %v94, 0.0
  %v117 = vadd.f32 %v97, 0.0
  %v118 = vadd.f32 %v100, 0.0
  %v119 = vadd.f32 %v103, 0.0
  %v120 = vadd.f32 %v106, 0.0
  %v121 = vadd.f32 %v109, 0.0
  %v122 = vadd.f32 %v112, 0.0
  %v123 = vadd.f32 %v115, 0.0
  %v124 = vadd.f32 %v28, %v29
  %125 = vadd.xlane.f32.xlu0 %v124
  %v126 = vpop.xlane.xlu0 %125
  %v127 = vadd.f32 %v30, %v31
  %128 = vadd.xlane.f32.xlu0 %v127
  %v129 = vpop.xlane.xlu0 %128
  %v130 = vadd.f32 %v32, %v33
  %131 = vadd.xlane.f32.xlu0 %v130
  %v132 = vpop.xlane.xlu0 %131
  %v133 = vadd.f32 %v34, %v35
  %134 = vadd.xlane.f32.xlu0 %v133
  %v135 = vpop.xlane.xlu0 %134
  %v136 = vadd.f32 %v36, %v37
  %137 = vadd.xlane.f32.xlu0 %v136
  %v138 = vpop.xlane.xlu0 %137
  %v139 = vadd.f32 %v38, %v39
  %140 = vadd.xlane.f32.xlu0 %v139
  %v141 = vpop.xlane.xlu0 %140
  %v142 = vadd.f32 %v40, %v41
  %143 = vadd.xlane.f32.xlu0 %v142
  %v144 = vpop.xlane.xlu0 %143
  %v145 = vadd.f32 %v42, %v43
  %146 = vadd.xlane.f32.xlu0 %v145
  %v147 = vpop.xlane.xlu0 %146
  %v148 = vadd.f32 %v68, %v126
  %v149 = vadd.f32 %v69, %v129
  %v150 = vadd.f32 %v70, %v132
  %v151 = vadd.f32 %v71, %v135
  %v152 = vadd.f32 %v72, %v138
  %v153 = vadd.f32 %v73, %v141
  %v154 = vadd.f32 %v74, %v144
  %v155 = vadd.f32 %v75, %v147
  %v156 = vmul.f32 %v28, %v28
  %v157 = vmul.f32 %v29, %v29
  %v158 = vmul.f32 %v30, %v30
  %v159 = vmul.f32 %v31, %v31
  %v160 = vmul.f32 %v32, %v32
  %v161 = vmul.f32 %v33, %v33
  %v162 = vmul.f32 %v34, %v34
  %v163 = vmul.f32 %v35, %v35
  %v164 = vmul.f32 %v36, %v36
  %v165 = vmul.f32 %v37, %v37
  %v166 = vmul.f32 %v38, %v38
  %v167 = vmul.f32 %v39, %v39
  %v168 = vmul.f32 %v40, %v40
  %v169 = vmul.f32 %v41, %v41
  %v170 = vmul.f32 %v42, %v42
  %v171 = vmul.f32 %v43, %v43
  %v172 = vadd.f32 %v156, %v157
  %173 = vadd.xlane.f32.xlu0 %v172
  %v174 = vpop.xlane.xlu0 %173
  %v175 = vadd.f32 %v158, %v159
  %176 = vadd.xlane.f32.xlu0 %v175
  %v177 = vpop.xlane.xlu0 %176
  %v178 = vadd.f32 %v160, %v161
  %179 = vadd.xlane.f32.xlu0 %v178
  %v180 = vpop.xlane.xlu0 %179
  %v181 = vadd.f32 %v162, %v163
  %182 = vadd.xlane.f32.xlu0 %v181
  %v183 = vpop.xlane.xlu0 %182
  %v184 = vadd.f32 %v164, %v165
  %185 = vadd.xlane.f32.xlu0 %v184
  %v186 = vpop.xlane.xlu0 %185
  %v187 = vadd.f32 %v166, %v167
  %188 = vadd.xlane.f32.xlu0 %v187
  %v189 = vpop.xlane.xlu0 %188
  %v190 = vadd.f32 %v168, %v169
  %191 = vadd.xlane.f32.xlu0 %v190
  %v192 = vpop.xlane.xlu0 %191
  %v193 = vadd.f32 %v170, %v171
  %194 = vadd.xlane.f32.xlu0 %v193
  %v195 = vpop.xlane.xlu0 %194
  %v196 = vadd.f32 %v116, %v174
  %v197 = vadd.f32 %v117, %v177
  %v198 = vadd.f32 %v118, %v180
  %v199 = vadd.f32 %v119, %v183
  %v200 = vadd.f32 %v120, %v186
  %v201 = vadd.f32 %v121, %v189
  %v202 = vadd.f32 %v122, %v192
  %v203 = vadd.f32 %v123, %v195
  %v204 = vmul.f32 %v148, 0.001953125
  %v205 = vmul.f32 %v149, 0.001953125
  %v206 = vmul.f32 %v150, 0.001953125
  %v207 = vmul.f32 %v151, 0.001953125
  %v208 = vmul.f32 %v152, 0.001953125
  %v209 = vmul.f32 %v153, 0.001953125
  %v210 = vmul.f32 %v154, 0.001953125
  %v211 = vmul.f32 %v155, 0.001953125
  %v212 = vmul.f32 %v196, 0.001953125
  %v213 = vmul.f32 %v197, 0.001953125
  %v214 = vmul.f32 %v198, 0.001953125
  %v215 = vmul.f32 %v199, 0.001953125
  %v216 = vmul.f32 %v200, 0.001953125
  %v217 = vmul.f32 %v201, 0.001953125
  %v218 = vmul.f32 %v202, 0.001953125
  %v219 = vmul.f32 %v203, 0.001953125
  %v220 = vmul.f32 %v204, %v204
  %v221 = vmul.f32 %v205, %v205
  %v222 = vmul.f32 %v206, %v206
  %v223 = vmul.f32 %v207, %v207
  %v224 = vmul.f32 %v208, %v208
  %v225 = vmul.f32 %v209, %v209
  %v226 = vmul.f32 %v210, %v210
  %v227 = vmul.f32 %v211, %v211
  %v228 = vsub.f32 %v212, %v220
  %v229 = vsub.f32 %v213, %v221
  %v230 = vsub.f32 %v214, %v222
  %v231 = vsub.f32 %v215, %v223
  %v232 = vsub.f32 %v216, %v224
  %v233 = vsub.f32 %v217, %v225
  %v234 = vsub.f32 %v218, %v226
  %v235 = vsub.f32 %v219, %v227
  %v236 = vmax.f32 %v228, 0.0
  %v237 = vmax.f32 %v229, 0.0
  %v238 = vmax.f32 %v230, 0.0
  %v239 = vmax.f32 %v231, 0.0
  %v240 = vmax.f32 %v232, 0.0
  %v241 = vmax.f32 %v233, 0.0
  %v242 = vmax.f32 %v234, 0.0
  %v243 = vmax.f32 %v235, 0.0
  %v244 = vld [vmem:[%s1] sm:$0xff]
  %v245 = vld [vmem:[%s1 + $0x8] sm:$0xff]
  %v246 = vld [vmem:[%s1 + $0x10] sm:$0xff]
  %v247 = vld [vmem:[%s1 + $0x18] sm:$0xff]
  %v248 = vld [vmem:[%s1 + $0x20] sm:$0xff]
  %v249 = vld [vmem:[%s1 + $0x28] sm:$0xff]
  %v250 = vld [vmem:[%s1 + $0x30] sm:$0xff]
  %v251 = vld [vmem:[%s1 + $0x38] sm:$0xff]
  %v252 = vadd.f32 %v236, 1e-05
  %v253 = vadd.f32 %v237, 1e-05
  %v254 = vadd.f32 %v238, 1e-05
  %v255 = vadd.f32 %v239, 1e-05
  %v256 = vadd.f32 %v240, 1e-05
  %v257 = vadd.f32 %v241, 1e-05
  %v258 = vadd.f32 %v242, 1e-05
  %v259 = vadd.f32 %v243, 1e-05
  %v260 = vrsqrt.pop %v252
  %v261 = vrsqrt.pop %v253
  %v262 = vrsqrt.pop %v254
  %v263 = vrsqrt.pop %v255
  %v264 = vrsqrt.pop %v256
  %v265 = vrsqrt.pop %v257
  %v266 = vrsqrt.pop %v258
  %v267 = vrsqrt.pop %v259
  %v268 = vmul.f32 %v244, %v260
  %v269 = vmul.f32 %v245, %v261
  %v270 = vmul.f32 %v246, %v262
  %v271 = vmul.f32 %v247, %v263
  %v272 = vmul.f32 %v248, %v264
  %v273 = vmul.f32 %v249, %v265
  %v274 = vmul.f32 %v250, %v266
  %v275 = vmul.f32 %v251, %v267
  %v276 = vadd.f32 %v268, 1.0
  %v277 = vadd.f32 %v269, 1.0
  %v278 = vadd.f32 %v270, 1.0
  %v279 = vadd.f32 %v271, 1.0
  %v280 = vadd.f32 %v272, 1.0
  %v281 = vadd.f32 %v273, 1.0
  %v282 = vadd.f32 %v274, 1.0
  %v283 = vadd.f32 %v275, 1.0
  %v284 = vmul.f32 %v204, %v268
  %v285 = vmul.f32 %v205, %v269
  %v286 = vmul.f32 %v206, %v270
  %v287 = vmul.f32 %v207, %v271
  %v288 = vmul.f32 %v208, %v272
  %v289 = vmul.f32 %v209, %v273
  %v290 = vmul.f32 %v210, %v274
  %v291 = vmul.f32 %v211, %v275
  %300 = vrot.lane.b32.xlu0 %v284, 1
  %v301 = vpop.permute.xlu0 %300
  %302 = vrot.lane.b32.xlu0 %v285, 1
  %v303 = vpop.permute.xlu0 %302
  %304 = vrot.lane.b32.xlu0 %v286, 1
  %v305 = vpop.permute.xlu0 %304
  %306 = vrot.lane.b32.xlu0 %v287, 1
  %v307 = vpop.permute.xlu0 %306
  %308 = vrot.lane.b32.xlu0 %v288, 1
  %v309 = vpop.permute.xlu0 %308
  %310 = vrot.lane.b32.xlu0 %v289, 1
  %v311 = vpop.permute.xlu0 %310
  %312 = vrot.lane.b32.xlu0 %v290, 1
  %v313 = vpop.permute.xlu0 %312
  %314 = vrot.lane.b32.xlu0 %v291, 1
  %v315 = vpop.permute.xlu0 %314
  %v324 = vsub.f32 %v244, %v301
  %v325 = vsub.f32 %v245, %v303
  %v326 = vsub.f32 %v246, %v305
  %v327 = vsub.f32 %v247, %v307
  %v328 = vsub.f32 %v248, %v309
  %v329 = vsub.f32 %v249, %v311
  %v330 = vsub.f32 %v250, %v313
  %v331 = vsub.f32 %v251, %v315
  %333 = vset.pattern.permute.xlu0 0
  %334 = vperm.xlu0 %333, %v276
  %v335 = vpop.permute.xlu0 %334
  %338 = vset.pattern.permute.xlu0 0
  %339 = vperm.xlu0 %338, %v277
  %v340 = vpop.permute.xlu0 %339
  %343 = vset.pattern.permute.xlu0 0
  %344 = vperm.xlu0 %343, %v278
  %v345 = vpop.permute.xlu0 %344
  %348 = vset.pattern.permute.xlu0 0
  %349 = vperm.xlu0 %348, %v279
  %v350 = vpop.permute.xlu0 %349
  %353 = vset.pattern.permute.xlu0 0
  %354 = vperm.xlu0 %353, %v280
  %v355 = vpop.permute.xlu0 %354
  %358 = vset.pattern.permute.xlu0 0
  %359 = vperm.xlu0 %358, %v281
  %v360 = vpop.permute.xlu0 %359
  %363 = vset.pattern.permute.xlu0 0
  %364 = vperm.xlu0 %363, %v282
  %v365 = vpop.permute.xlu0 %364
  %368 = vset.pattern.permute.xlu0 0
  %369 = vperm.xlu0 %368, %v283
  %v370 = vpop.permute.xlu0 %369
  %373 = vset.pattern.permute.xlu0 1
  %374 = vperm.xlu0 %373, %v324
  %v375 = vpop.permute.xlu0 %374
  %378 = vset.pattern.permute.xlu0 1
  %379 = vperm.xlu0 %378, %v325
  %v380 = vpop.permute.xlu0 %379
  %383 = vset.pattern.permute.xlu0 1
  %384 = vperm.xlu0 %383, %v326
  %v385 = vpop.permute.xlu0 %384
  %388 = vset.pattern.permute.xlu0 1
  %389 = vperm.xlu0 %388, %v327
  %v390 = vpop.permute.xlu0 %389
  %393 = vset.pattern.permute.xlu0 1
  %394 = vperm.xlu0 %393, %v328
  %v395 = vpop.permute.xlu0 %394
  %398 = vset.pattern.permute.xlu0 1
  %399 = vperm.xlu0 %398, %v329
  %v400 = vpop.permute.xlu0 %399
  %403 = vset.pattern.permute.xlu0 1
  %404 = vperm.xlu0 %403, %v330
  %v405 = vpop.permute.xlu0 %404
  %408 = vset.pattern.permute.xlu0 1
  %409 = vperm.xlu0 %408, %v331
  %v410 = vpop.permute.xlu0 %409
  %v412 = vmul.f32 %v11, %v335
  %v413 = vmul.f32 %v12, %v335
  %v414 = vmul.f32 %v13, %v340
  %v415 = vmul.f32 %v14, %v340
  %v416 = vmul.f32 %v15, %v345
  %v417 = vmul.f32 %v16, %v345
  %v418 = vmul.f32 %v17, %v350
  %v419 = vmul.f32 %v18, %v350
  %v420 = vmul.f32 %v19, %v355
  %v421 = vmul.f32 %v20, %v355
  %v422 = vmul.f32 %v21, %v360
  %v423 = vmul.f32 %v22, %v360
  %v424 = vmul.f32 %v23, %v365
  %v425 = vmul.f32 %v24, %v365
  %v426 = vmul.f32 %v25, %v370
  %v427 = vmul.f32 %v26, %v370
  %v428 = vadd.f32 %v412, %v375
  %v429 = vadd.f32 %v413, %v375
  %v430 = vadd.f32 %v414, %v380
  %v431 = vadd.f32 %v415, %v380
  %v432 = vadd.f32 %v416, %v385
  %v433 = vadd.f32 %v417, %v385
  %v434 = vadd.f32 %v418, %v390
  %v435 = vadd.f32 %v419, %v390
  %v436 = vadd.f32 %v420, %v395
  %v437 = vadd.f32 %v421, %v395
  %v438 = vadd.f32 %v422, %v400
  %v439 = vadd.f32 %v423, %v400
  %v440 = vadd.f32 %v424, %v405
  %v441 = vadd.f32 %v425, %v405
  %v442 = vadd.f32 %v426, %v410
  %v443 = vadd.f32 %v427, %v410
  %v444 = vmax.f32 %v428, 0.0
  %v445 = vmax.f32 %v429, 0.0
  %v446 = vmax.f32 %v430, 0.0
  %v447 = vmax.f32 %v431, 0.0
  %v448 = vmax.f32 %v432, 0.0
  %v449 = vmax.f32 %v433, 0.0
  %v450 = vmax.f32 %v434, 0.0
  %v451 = vmax.f32 %v435, 0.0
  %v452 = vmax.f32 %v436, 0.0
  %v453 = vmax.f32 %v437, 0.0
  %v454 = vmax.f32 %v438, 0.0
  %v455 = vmax.f32 %v439, 0.0
  %v456 = vmax.f32 %v440, 0.0
  %v457 = vmax.f32 %v441, 0.0
  %v458 = vmax.f32 %v442, 0.0
  %v459 = vmax.f32 %v443, 0.0
  %460 = vst [vmem:[%s2] sm:$0xff] %v444
  %461 = vst [vmem:[%s2 + $0x8] sm:$0xff] %v445
  %462 = vst [vmem:[%s2 + $0x10] sm:$0xff] %v446
  %463 = vst [vmem:[%s2 + $0x18] sm:$0xff] %v447
  %464 = vst [vmem:[%s2 + $0x20] sm:$0xff] %v448
  %465 = vst [vmem:[%s2 + $0x28] sm:$0xff] %v449
  %466 = vst [vmem:[%s2 + $0x30] sm:$0xff] %v450
  %467 = vst [vmem:[%s2 + $0x38] sm:$0xff] %v451
  %468 = vst [vmem:[%s2 + $0x40] sm:$0xff] %v452
  %469 = vst [vmem:[%s2 + $0x48] sm:$0xff] %v453
  %470 = vst [vmem:[%s2 + $0x50] sm:$0xff] %v454
  %471 = vst [vmem:[%s2 + $0x58] sm:$0xff] %v455
  %472 = vst [vmem:[%s2 + $0x60] sm:$0xff] %v456
  %473 = vst [vmem:[%s2 + $0x68] sm:$0xff] %v457
  %474 = vst [vmem:[%s2 + $0x70] sm:$0xff] %v458
  %475 = vst [vmem:[%s2 + $0x78] sm:$0xff] %v459
  %v476 = vmul.f32 %v28, %v335
  %v477 = vmul.f32 %v29, %v335
  %v478 = vmul.f32 %v30, %v340
  %v479 = vmul.f32 %v31, %v340
  %v480 = vmul.f32 %v32, %v345
  %v481 = vmul.f32 %v33, %v345
  %v482 = vmul.f32 %v34, %v350
  %v483 = vmul.f32 %v35, %v350
  %v484 = vmul.f32 %v36, %v355
  %v485 = vmul.f32 %v37, %v355
  %v486 = vmul.f32 %v38, %v360
  %v487 = vmul.f32 %v39, %v360
  %v488 = vmul.f32 %v40, %v365
  %v489 = vmul.f32 %v41, %v365
  %v490 = vmul.f32 %v42, %v370
  %v491 = vmul.f32 %v43, %v370
  %v492 = vadd.f32 %v476, %v375
  %v493 = vadd.f32 %v477, %v375
  %v494 = vadd.f32 %v478, %v380
  %v495 = vadd.f32 %v479, %v380
  %v496 = vadd.f32 %v480, %v385
  %v497 = vadd.f32 %v481, %v385
  %v498 = vadd.f32 %v482, %v390
  %v499 = vadd.f32 %v483, %v390
  %v500 = vadd.f32 %v484, %v395
  %v501 = vadd.f32 %v485, %v395
  %v502 = vadd.f32 %v486, %v400
  %v503 = vadd.f32 %v487, %v400
  %v504 = vadd.f32 %v488, %v405
  %v505 = vadd.f32 %v489, %v405
  %v506 = vadd.f32 %v490, %v410
  %v507 = vadd.f32 %v491, %v410
  %v508 = vmax.f32 %v492, 0.0
  %v509 = vmax.f32 %v493, 0.0
  %v510 = vmax.f32 %v494, 0.0
  %v511 = vmax.f32 %v495, 0.0
  %v512 = vmax.f32 %v496, 0.0
  %v513 = vmax.f32 %v497, 0.0
  %v514 = vmax.f32 %v498, 0.0
  %v515 = vmax.f32 %v499, 0.0
  %v516 = vmax.f32 %v500, 0.0
  %v517 = vmax.f32 %v501, 0.0
  %v518 = vmax.f32 %v502, 0.0
  %v519 = vmax.f32 %v503, 0.0
  %v520 = vmax.f32 %v504, 0.0
  %v521 = vmax.f32 %v505, 0.0
  %v522 = vmax.f32 %v506, 0.0
  %v523 = vmax.f32 %v507, 0.0
  %s524 = scalar_lea.vmem %s2, 128
  %525 = vst [vmem:[%s524] sm:$0xff] %v508
  %526 = vst [vmem:[%s524 + $0x8] sm:$0xff] %v509
  %527 = vst [vmem:[%s524 + $0x10] sm:$0xff] %v510
  %528 = vst [vmem:[%s524 + $0x18] sm:$0xff] %v511
  %529 = vst [vmem:[%s524 + $0x20] sm:$0xff] %v512
  %530 = vst [vmem:[%s524 + $0x28] sm:$0xff] %v513
  %531 = vst [vmem:[%s524 + $0x30] sm:$0xff] %v514
  %532 = vst [vmem:[%s524 + $0x38] sm:$0xff] %v515
  %533 = vst [vmem:[%s524 + $0x40] sm:$0xff] %v516
  %534 = vst [vmem:[%s524 + $0x48] sm:$0xff] %v517
  %535 = vst [vmem:[%s524 + $0x50] sm:$0xff] %v518
  %536 = vst [vmem:[%s524 + $0x58] sm:$0xff] %v519
  %537 = vst [vmem:[%s524 + $0x60] sm:$0xff] %v520
  %538 = vst [vmem:[%s524 + $0x68] sm:$0xff] %v521
  %539 = vst [vmem:[%s524 + $0x70] sm:$0xff] %v522
  %540 = vst [vmem:[%s524 + $0x78] sm:$0xff] %v523
  // Predicated region
  $region10: #{model_forward.1} parent=0 // pred_check
    _
  $region11: #{model_forward.1} parent=0 // pred_check_branch
    %542 = sbr.rel (0) target = $region13
  $region12: #{model_forward.1} parent=0 // pred_region
    _
  $region13: #{model_forward.1} parent=0 // pred_fallthru
    _
  // Predicated region
  $region14: #{model_forward.1} parent=0 // pred_check
    _
  $region15: #{model_forward.1} parent=0 // pred_check_branch
    %544 = sbr.rel (0) target = $region17
  $region16: #{model_forward.1} parent=0 // pred_region
    _
  $region17: #{model_forward.1} parent=0 // pred_fallthru
    _

</llo_original>
